<compile_context>
chip_gen: v6e
topology: v6e:2x2x1
jax: 0.10.0
libtpu: 0.0.40
codegen_flags: <defaults>
</compile_context>

<pallas_src>
import jax
import jax.numpy as jnp
from jax.experimental import pallas as pl
from jax.experimental.pallas import tpu as pltpu


def _resolve_size(total, size):
    """Resolve a torch-style view size (with at most one -1) for `total` elems."""
    size = list(size)
    neg = [i for i, s in enumerate(size) if s == -1]
    if len(neg) > 1:
        raise ValueError("only one -1 allowed in view size")
    if neg:
        known = 1
        for s in size:
            if s != -1:
                known *= s
        if known == 0 or total % known != 0:
            raise ValueError("view size incompatible with number of elements")
        size[neg[0]] = total // known
    prod = 1
    for s in size:
        prod *= s
    if prod != total:
        raise ValueError("view size incompatible with number of elements")
    return tuple(size)


def _dma_copy_kernel(x_hbm, o_hbm, sem):
    # One bulk HBM->HBM DMA of the whole array: zero TensorCore compute, no
    # VMEM staging, no tiling or lane-alignment concerns.
    cp = pltpu.make_async_copy(x_hbm, o_hbm, sem)
    cp.start()
    cp.wait()


def _pallas_copy(x):
    """Physically copy `x` through a single HBM->HBM DMA (shape/dtype agnostic)."""
    nbytes = x.size * jnp.dtype(x.dtype).itemsize
    return pl.pallas_call(
        _dma_copy_kernel,
        out_shape=jax.ShapeDtypeStruct(x.shape, x.dtype),
        in_specs=[pl.BlockSpec(memory_space=pl.ANY)],   # raw HBM ref, no auto-DMA
        out_specs=pl.BlockSpec(memory_space=pl.ANY),    # raw HBM ref, no auto-DMA
        scratch_shapes=[pltpu.SemaphoreType.DMA(())],
        compiler_params=pltpu.CompilerParams(has_side_effects=True),
        cost_estimate=pl.CostEstimate(
            flops=0, transcendentals=0, bytes_accessed=2 * nbytes),
    )(x)


def view_forward(x, size, force_copy=False):
    """Pallas/JAX implementation of View(size).forward(x).

    Default: metadata-only reshape (exactly what a contiguous torch .view is).
    force_copy=True: route the bytes through a single Pallas HBM->HBM DMA.
    """
    total = x.size
    out_shape = _resolve_size(total, size)

    if not force_copy or total == 0:
        # A contiguous row-major view is metadata-only: zero HBM traffic.
        return jnp.reshape(x, out_shape)

    # TODO(synk): torch .view raises on non-contiguous tensors; JAX arrays are
    # always logically contiguous, so that check has no equivalent here.
    y = _pallas_copy(x)               # the actual byte movement (one DMA)
    return jnp.reshape(y, out_shape)  # metadata only


class View:
    """JAX/Pallas analogue of the PyTorch View module (no parameters)."""

    def __init__(self, size, force_copy=False):
        self.size = size
        self.force_copy = force_copy

    def __call__(self, tensor):
        return view_forward(tensor, self.size, force_copy=self.force_copy)


if __name__ == "__main__":
    key = jax.random.PRNGKey(0)

    # Case 1: typical betaVAE usage — View((-1, C*H*W)) on a conv feature map.
    x1 = jax.random.normal(key, (2, 4, 16, 16), dtype=jnp.float32)
    view1 = View((-1, 4 * 16 * 16))
    y1_fast = jax.block_until_ready(view1(x1))                  # metadata path
    y1_copy = jax.block_until_ready(
        view_forward(x1, (-1, 4 * 16 * 16), force_copy=True))   # DMA kernel path
    y1_ref = jnp.reshape(x1, (-1, 4 * 16 * 16))
    assert y1_fast.shape == (2, 1024) and y1_copy.shape == (2, 1024)
    assert y1_copy.dtype == x1.dtype
    assert jnp.array_equal(y1_fast, y1_ref)
    assert jnp.array_equal(y1_copy, y1_ref)

    # Case 2: awkward row count / 128-aligned total — shape is irrelevant to
    # the bulk DMA, no tiling or masked stores involved.
    x2 = jax.random.normal(jax.random.fold_in(key, 1), (3, 5, 128, 13),
                           dtype=jnp.float32)
    y2 = jax.block_until_ready(view_forward(x2, (15, -1), force_copy=True))
    y2_ref = jnp.reshape(x2, (15, -1))
    assert y2.shape == y2_ref.shape
    assert jnp.array_equal(y2, y2_ref)

    # Case 3: total not a multiple of 128 — previously needed a main/tail
    # split + concatenate; now a single DMA handles it directly.
    x3 = jax.random.normal(jax.random.fold_in(key, 2), (2, 3, 5, 7),
                           dtype=jnp.float32)
    y3 = jax.block_until_ready(view_forward(x3, (6, 35), force_copy=True))
    y3_ref = jnp.reshape(x3, (6, 35))
    assert y3.shape == (6, 35)
    assert jnp.array_equal(y3, y3_ref)

    # Case 4: packed dtype (bf16) — DMA is dtype-agnostic (no sublane rounding
    # concerns since nothing is staged through vregs).
    x4 = jax.random.normal(jax.random.fold_in(key, 3), (2, 4, 8, 8),
                           dtype=jnp.bfloat16)
    y4 = jax.block_until_ready(view_forward(x4, (-1, 8 * 8), force_copy=True))
    y4_ref = jnp.reshape(x4, (-1, 8 * 8))
    assert y4.dtype == jnp.bfloat16
    assert jnp.array_equal(y4, y4_ref)

    print("KERNEL_OK")
</pallas_src>

<mosaic_0001>
module attributes {stable_mosaic.version = 11 : i64} {
  func.func @_dma_copy_kernel(%arg0: memref<2x4x16x16xf32, #tpu.memory_space<any>>, %arg1: memref<2x4x16x16xf32, #tpu.memory_space<any>>, %arg2: memref<!tpu.dma_semaphore, #tpu.memory_space<semaphore_mem>>) attributes {dimension_semantics = [], scalar_prefetch = 0 : i64, scratch_operands = 1 : i64, tpu.core_type = #tpu.core_type<tc>} {
    tpu.enqueue_dma source(%arg0 : memref<2x4x16x16xf32, #tpu.memory_space<any>>) target(%arg1 : memref<2x4x16x16xf32, #tpu.memory_space<any>>) target_semaphore(%arg2 : memref<!tpu.dma_semaphore, #tpu.memory_space<semaphore_mem>>)
    tpu.wait_dma2 semaphore(%arg2 : memref<!tpu.dma_semaphore, #tpu.memory_space<semaphore_mem>>) src(%arg0 : memref<2x4x16x16xf32, #tpu.memory_space<any>>) dst(%arg1 : memref<2x4x16x16xf32, #tpu.memory_space<any>>)
    return
  }
}

</mosaic_0001>

<llo_original>
// kernel: tpu_custom_call.1
$region0: #{tpu_custom_call.1}
  #allocation0 [shape = 'u32[]', space=smem, size = 0x4, offset = 0x4, fixed_abs, tag = 'smem constant byte address 0x4 - core index']
  #allocation1 [shape = 'u32[144,128]{1,0:T(1,128)}', space=vmem, size = 0x12000, scoped, tag = 'internal scratch']
  #allocation2 [shape = 's32[1]{0}', space=sflag, size = 0x4, scoped, tag = 'scratch operand']
  #allocation3 [shape = 's32[]', space=sflag, size = 0x4, offset = 0, fixed_abs, tag = 'sflag constant byte address 0x0 - dummy sync flag']
  #allocation4 [shape = 'u32[0]{0}', space=smem, size = 0, offset = 0, fixed_abs, tag = 'smem constant byte address 0x0 - null']
  %s0 = inlined_call_operand.hbm [shape: f32[2,4,16,16], index: 0, kind: input, shape index: {}]
  %s1 = inlined_call_operand.hbm [shape: f32[2,4,16,16], index: 1, kind: output, shape index: {}]
  %s2 = sld [smem:[#allocation0]]
  $region2: #{tpu_custom_call.1} parent=0
    _
  %s4 = ssub.s32 1, %s2
  %s5 = scalar_select 0, %s4, %s2
  %s7 = sshll.u32 1, 14
  %s8 = sxor.u32 4294967295, %s7
  %12 = dma.general %s0, 2048, %s1, [#allocation2], 131072, [#allocation4], 0, 0
  %s13 = smul.u32 2, 4
  %s14 = smul.u32 %s13, 16
  %s15 = smul.u32 %s14, 1
  %s16 = sshll.u32 %s15, 4
  %17 = dma.done [#allocation2], %s16
  %18 = vsyncmov [#allocation2]
  %s19 = vpop.sfrf %18
  %p20 = scmp.eq.s32.totalorder %s19, 0
  %p21 = pneg %p20
  %23 = shalt.err (%p21)

</llo_original>
